<compile_context>
chip_gen: v7x
topology: tpu7x:2x2x1
jax: 0.10.0
libtpu: 0.0.40
codegen_flags: <defaults>
</compile_context>

<pallas_src>
import functools

import jax
import jax.numpy as jnp
from jax.experimental import pallas as pl
from jax.experimental.pallas import tpu as pltpu


def _round_up(x, m):
    return (x + m - 1) // m * m


W_ROWS = 80   # weight slab rows
V_ROWS = 64   # vector slab rows


def _slab_dims(s_dim):
    s_pad = max(8, _round_up(s_dim, 8))
    w_cols = max(128, _round_up(s_pad, 128))
    return s_pad, w_cols


# ---------------------------------------------------------------------------
# Packed slab layout (feature-major / transposed weights).
#
# Weight slab  (80, w_cols):
#   rows [0:10),  cols [0:s_dim)  : W_lstm_s^T        (10, s_dim)
#   rows [16:46), cols [0:10)     : W_get_action1^T   (30, 10)
#   rows [48:78), cols [0:10)     : W_get_value^T     (30, 10)
# Vector slab  (64, 128):
#   col 0, rows [0:10)   : b_lstm_s
#   col 1, rows [0:30)   : b_get_action1       (fused layer-2 bias column)
#   col 1, rows [32:62)  : b_get_value
#   col 2, rows [0:30)   : W_get_action_features (rank-1 column, VPU broadcast)
#   col 3, rows [0:30)   : b_get_action_features
#   row 0, cols [64:94)  : W_get_action2^T   (1, 30)
#   row 1, cols [64:94)  : W_get_Q_Value^T   (1, 30)
#   row 0, col 96 / 97   : b_get_action2 / b_get_Q_Value
# ---------------------------------------------------------------------------
def pack_params(params, s_dim, dtype=jnp.float32):
    """Pack per-layer (W, b) params into two tile-aligned resident VMEM slabs."""
    s_pad, w_cols = _slab_dims(s_dim)
    w_slab = jnp.zeros((W_ROWS, w_cols), jnp.float32)
    v_slab = jnp.zeros((V_ROWS, 128), jnp.float32)

    w_ls, b_ls = params["lstm_s"]
    w_a1, b_a1 = params["get_action1"]
    w_a2, b_a2 = params["get_action2"]
    w_af, b_af = params["get_action_features"]
    w_v, b_v = params["get_value"]
    w_q, b_q = params["get_Q_Value"]

    w_slab = w_slab.at[0:10, 0:s_dim].set(w_ls.T)
    w_slab = w_slab.at[16:46, 0:10].set(w_a1.T)
    w_slab = w_slab.at[48:78, 0:10].set(w_v.T)

    v_slab = v_slab.at[0:10, 0].set(b_ls[0])
    v_slab = v_slab.at[0:30, 1].set(b_a1[0])
    v_slab = v_slab.at[32:62, 1].set(b_v[0])
    v_slab = v_slab.at[0:30, 2].set(w_af[0])
    v_slab = v_slab.at[0:30, 3].set(b_af[0])
    v_slab = v_slab.at[0, 64:94].set(w_a2[:, 0])
    v_slab = v_slab.at[1, 64:94].set(w_q[:, 0])
    v_slab = v_slab.at[0, 96].set(b_a2[0, 0])
    v_slab = v_slab.at[0, 97].set(b_q[0, 0])
    return w_slab.astype(dtype), v_slab.astype(dtype)


def net_kernel(*refs, s_pad, get_action, set_action):
    if set_action:
        s_ref, act_ref, w_ref, v_ref, q_ref = refs
    elif get_action:
        s_ref, w_ref, v_ref, a_out_ref = refs
    else:
        s_ref, w_ref, v_ref, q_ref, a_out_ref = refs

    cdt = w_ref.dtype           # compute/storage dtype of the slabs (f32 or bf16)
    s_t = s_ref[...]            # (s_pad, TB)  batch on lanes

    # --- layer 1: lstm_s + relu --------------------------------------------
    w1 = w_ref[0:16, 0:s_pad]                 # (16, s_pad), zero-padded K rows
    b1 = v_ref[0:16, 0:1]                     # (16, 1) lane-broadcast bias
    s_tmp = jnp.maximum(
        jnp.dot(w1, s_t, preferred_element_type=jnp.float32) + b1, 0.0)  # (16, TB)

    # --- fused layer 2: get_action1 (rows 0:30) | get_value (rows 32:62) ----
    w2 = w_ref[16:80, 0:16]                   # (64, 16)
    b2 = v_ref[0:64, 1:2]                     # (64, 1)
    h = jnp.dot(w2, s_tmp.astype(cdt),
                preferred_element_type=jnp.float32) + b2                 # (64, TB)

    def q_head(v_val, act_row):
        # rank-1 (1, in) contraction of get_action_features -> VPU broadcast.
        w_af = v_ref[0:32, 2:3]               # (32, 1)
        b_af = v_ref[0:32, 3:4]               # (32, 1)
        av = act_row * w_af + b_af            # (32, TB)
        z = jnp.maximum(v_val + av, 0.0)      # (32, TB), sublane-aligned add
        wq = v_ref[1:2, 64:96]                # (1, 32)
        b_q = v_ref[0:1, 97:98]
        return jnp.dot(wq, z.astype(cdt),
                       preferred_element_type=jnp.float32) + b_q         # (1, TB)

    if set_action:
        v_val = h[32:64, :]
        q = q_head(v_val, act_ref[...].astype(jnp.float32))
        q_ref[...] = q.astype(q_ref.dtype)
        return

    # --- action head ---------------------------------------------------------
    a1 = jnp.maximum(h[0:32, :], 0.0)         # (32, TB), rows 30:32 are zero
    wa2 = v_ref[0:1, 64:96]                   # (1, 32)
    b_a2 = v_ref[0:1, 96:97]
    act = jnp.tanh(jnp.dot(wa2, a1.astype(cdt),
                           preferred_element_type=jnp.float32) + b_a2) * 2.0  # (1, TB)

    if get_action:
        a_out_ref[...] = act.astype(a_out_ref.dtype)
        return

    # default path: emit both q and action (lane-dense rows)
    a_out_ref[...] = act.astype(a_out_ref.dtype)
    v_val = h[32:64, :]
    q_ref[...] = q_head(v_val, act).astype(q_ref.dtype)


def net_forward(s, packed_params, action=None, get_action=False,
                set_action=False, return_action=False, block_b=4096,
                core_parallel=False):
    """Forward pass. `packed_params` = pack_params(params, s_dim) (built once).

    core_parallel=True uses pltpu.CORE_PARALLEL on the batch grid axis (use on
    v7x with B > block_b so both TensorCores get tiles)."""
    w_slab, v_slab = packed_params
    B, s_dim = s.shape
    s_pad, w_cols = _slab_dims(s_dim)
    assert w_slab.shape == (W_ROWS, w_cols) and v_slab.shape == (V_ROWS, 128)
    cdt = w_slab.dtype

    # batch tiling: single large tile for B <= block_b, else grid over B.
    block_b = _round_up(block_b, 128)
    tb = _round_up(B, 128) if B <= block_b else block_b
    b_pad = _round_up(B, tb)
    n_tiles = b_pad // tb
    grid = (n_tiles,)

    # feature-major (lane = batch) padded input; feature dim padded to s_pad.
    s_t = jnp.pad(s.astype(cdt), ((0, b_pad - B), (0, s_pad - s_dim))).T  # (s_pad, b_pad)

    def streamed_spec(rows):
        idx = lambda i: (0, i)
        if n_tiles > 1:
            try:  # 3-deep pipeline on streamed operands when actually tiled
                return pl.BlockSpec((rows, tb), idx, pipeline_mode=pl.Buffered(3))
            except (TypeError, AttributeError):
                pass
        return pl.BlockSpec((rows, tb), idx)

    def resident_spec(shape):
        return pl.BlockSpec(shape, lambda i: (0, 0))   # stays resident in VMEM

    in_specs = [streamed_spec(s_pad)]
    inputs = [s_t]
    if set_action:
        if action is None:
            raise ValueError("set_action=True requires an action array")
        a_t = jnp.pad(action.astype(cdt), ((0, b_pad - B), (0, 0))).T     # (1, b_pad)
        in_specs.append(streamed_spec(1))
        inputs.append(a_t)
    # get_action / default paths never allocate or DMA the dummy action.
    in_specs += [resident_spec(w_slab.shape), resident_spec(v_slab.shape)]
    inputs += [w_slab, v_slab]

    out_row = jax.ShapeDtypeStruct((1, b_pad), jnp.float32)
    out_row_spec = pl.BlockSpec((1, tb), lambda i: (0, i))                # lane-dense
    if set_action or get_action:
        out_shape, out_specs = out_row, out_row_spec
    else:
        out_shape, out_specs = (out_row, out_row), (out_row_spec, out_row_spec)

    kernel = functools.partial(net_kernel, s_pad=s_pad,
                               get_action=get_action, set_action=set_action)

    dim_sem = (pltpu.CORE_PARALLEL,) if core_parallel else ("parallel",)
    out = pl.pallas_call(
        kernel,
        out_shape=out_shape,
        grid=grid,
        in_specs=in_specs,
        out_specs=out_specs,
        compiler_params=pltpu.CompilerParams(dimension_semantics=dim_sem),
    )(*inputs)

    def as_col(row):                    # (1, b_pad) lane-major -> (B, 1)
        return row[0, :B].reshape(B, 1)

    if set_action or get_action:
        return as_col(out)
    q_row, a_row = out
    if return_action:
        return as_col(q_row), as_col(a_row)
    return as_col(q_row)


def init_params(key, s_dim):
    """PyTorch-style uniform(+-1/sqrt(fan_in)) init; weights stored (in, out)."""
    layer_dims = {
        "lstm_s": (s_dim, 10),
        "get_action1": (10, 30),
        "get_action2": (30, 1),
        "get_action_features": (1, 30),
        "get_value": (10, 30),
        "get_Q_Value": (30, 1),
    }
    params = {}
    keys = jax.random.split(key, 2 * len(layer_dims))
    for i, (name, (fan_in, fan_out)) in enumerate(layer_dims.items()):
        bound = 1.0 / (fan_in ** 0.5)
        w = jax.random.uniform(keys[2 * i], (fan_in, fan_out),
                               jnp.float32, -bound, bound)
        b = jax.random.uniform(keys[2 * i + 1], (1, fan_out),
                               jnp.float32, -bound, bound)
        params[name] = (w, b)
    return params


def net_forward_ref(s, params, action=None, get_action=False, set_action=False):
    """Pure-JAX reference matching the PyTorch forward."""
    def lin(x, name):
        w, b = params[name]
        return x @ w + b

    s_tmp = jax.nn.relu(lin(s, "lstm_s"))
    if set_action:
        v = lin(s_tmp, "get_value")
        av = lin(action, "get_action_features")
        return lin(jax.nn.relu(av + v), "get_Q_Value")
    a = jax.nn.relu(lin(s_tmp, "get_action1"))
    a = jnp.tanh(lin(a, "get_action2")) * 2.0
    if get_action:
        return a
    v = lin(s_tmp, "get_value")
    av = lin(a, "get_action_features")
    return lin(jax.nn.relu(v + av), "get_Q_Value")


if __name__ == "__main__":
    key = jax.random.PRNGKey(0)
    k_param, k_s, k_a = jax.random.split(key, 3)

    B, s_dim = 8, 4
    params = init_params(k_param, s_dim)
    packed = pack_params(params, s_dim)              # built once, reused
    s = jax.random.normal(k_s, (B, s_dim), jnp.float32)
    action = jax.random.normal(k_a, (B, 1), jnp.float32)

    # default path -> q_value
    q = net_forward(s, packed)
    # get_action path -> scaled tanh action
    a = net_forward(s, packed, get_action=True)
    # set_action path -> q_value from external action
    q_sa = net_forward(s, packed, action=action, set_action=True)
    # fused actor+critic path -> (q_value, action) from one pallas_call
    q_both, a_both = net_forward(s, packed, return_action=True)
    jax.block_until_ready((q, a, q_sa, q_both, a_both))

    q_ref = net_forward_ref(s, params)
    a_ref = net_forward_ref(s, params, get_action=True)
    qsa_ref = net_forward_ref(s, params, action=action, set_action=True)
    assert jnp.allclose(q, q_ref, atol=1e-5)
    assert jnp.allclose(a, a_ref, atol=1e-5)
    assert jnp.allclose(q_sa, qsa_ref, atol=1e-5)
    assert jnp.allclose(q_both, q_ref, atol=1e-5)
    assert jnp.allclose(a_both, a_ref, atol=1e-5)

    # exercise the multi-tile (grid > 1, Buffered(3)) path with a tiny tile
    B2 = 300
    s2 = jax.random.normal(jax.random.PRNGKey(1), (B2, s_dim), jnp.float32)
    q_big = net_forward(s2, packed, block_b=128)
    assert jnp.allclose(q_big, net_forward_ref(s2, params), atol=1e-5)

    print("KERNEL_OK")
</pallas_src>

<mosaic_0001>
module attributes {stable_mosaic.version = 11 : i64} {
  func.func @net_kernel(%arg0: i32, %arg1: memref<8x128xf32, #tpu.memory_space<vmem>>, %arg2: memref<80x128xf32, #tpu.memory_space<vmem>>, %arg3: memref<64x128xf32, #tpu.memory_space<vmem>>, %arg4: memref<1x128xf32, #tpu.memory_space<vmem>>, %arg5: memref<1x128xf32, #tpu.memory_space<vmem>>) attributes {dimension_semantics = [#tpu.dimension_semantics<parallel>], iteration_bounds = array<i64: 1>, scalar_prefetch = 0 : i64, scratch_operands = 0 : i64, tpu.core_type = #tpu.core_type<tc>, window_params = [{transform_indices = @transform_0, window_bounds = array<i64: 8, 128>}, {pipeline_mode = #tpu.pipeline_mode<synchronous>, transform_indices = @transform_1, window_bounds = array<i64: 80, 128>}, {pipeline_mode = #tpu.pipeline_mode<synchronous>, transform_indices = @transform_2, window_bounds = array<i64: 64, 128>}, {transform_indices = @transform_3, window_bounds = array<i64: 1, 128>}, {transform_indices = @transform_4, window_bounds = array<i64: 1, 128>}]} {
    %c0 = arith.constant 0 : index
    %c0_0 = arith.constant 0 : index
    %0 = vector.load %arg1[%c0, %c0_0] : memref<8x128xf32, #tpu.memory_space<vmem>>, vector<8x128xf32>
    %c0_1 = arith.constant 0 : index
    %c0_2 = arith.constant 0 : index
    %1 = vector.load %arg2[%c0_1, %c0_2] : memref<80x128xf32, #tpu.memory_space<vmem>>, vector<16x8xf32>
    %c0_3 = arith.constant 0 : index
    %c0_4 = arith.constant 0 : index
    %2 = vector.load %arg3[%c0_3, %c0_4] : memref<64x128xf32, #tpu.memory_space<vmem>>, vector<16x1xf32>
    %cst = arith.constant dense<0.000000e+00> : vector<16x128xf32>
    %3 = tpu.matmul %1, %0, %cst {dimension_numbers = #tpu.dot_dimension_numbers<[1], [0], [0], [1], [0, 0, 1, 1], [], []>} : vector<16x8xf32>, vector<8x128xf32>, vector<16x128xf32> -> vector<16x128xf32>
    %4 = vector.broadcast %2 : vector<16x1xf32> to vector<16x128xf32>
    %5 = arith.addf %3, %4 : vector<16x128xf32>
    %cst_5 = arith.constant 0.000000e+00 : f32
    %6 = vector.broadcast %cst_5 : f32 to vector<16x128xf32>
    %7 = arith.maximumf %5, %6 : vector<16x128xf32>
    %c16 = arith.constant 16 : index
    %c0_6 = arith.constant 0 : index
    %8 = vector.load %arg2[%c16, %c0_6] : memref<80x128xf32, #tpu.memory_space<vmem>>, vector<64x16xf32>
    %c0_7 = arith.constant 0 : index
    %c1 = arith.constant 1 : index
    %9 = vector.load %arg3[%c0_7, %c1] : memref<64x128xf32, #tpu.memory_space<vmem>>, vector<64x1xf32>
    %cst_8 = arith.constant dense<0.000000e+00> : vector<64x128xf32>
    %10 = tpu.matmul %8, %7, %cst_8 {dimension_numbers = #tpu.dot_dimension_numbers<[1], [0], [0], [1], [0, 0, 1, 1], [], []>} : vector<64x16xf32>, vector<16x128xf32>, vector<64x128xf32> -> vector<64x128xf32>
    %11 = vector.broadcast %9 : vector<64x1xf32> to vector<64x128xf32>
    %12 = arith.addf %10, %11 : vector<64x128xf32>
    %13 = vector.extract_strided_slice %12 {offsets = [0, 0], sizes = [32, 128], strides = [1, 1]} : vector<64x128xf32> to vector<32x128xf32>
    %cst_9 = arith.constant 0.000000e+00 : f32
    %14 = vector.broadcast %cst_9 : f32 to vector<32x128xf32>
    %15 = arith.maximumf %13, %14 : vector<32x128xf32>
    %c0_10 = arith.constant 0 : index
    %c64 = arith.constant 64 : index
    %16 = vector.load %arg3[%c0_10, %c64] : memref<64x128xf32, #tpu.memory_space<vmem>>, vector<1x32xf32>
    %c0_11 = arith.constant 0 : index
    %c96 = arith.constant 96 : index
    %17 = vector.load %arg3[%c0_11, %c96] : memref<64x128xf32, #tpu.memory_space<vmem>>, vector<1x1xf32>
    %cst_12 = arith.constant dense<0.000000e+00> : vector<1x128xf32>
    %18 = tpu.matmul %16, %15, %cst_12 {dimension_numbers = #tpu.dot_dimension_numbers<[1], [0], [0], [1], [0, 0, 1, 1], [], []>} : vector<1x32xf32>, vector<32x128xf32>, vector<1x128xf32> -> vector<1x128xf32>
    %19 = vector.broadcast %17 : vector<1x1xf32> to vector<1x128xf32>
    %20 = arith.addf %18, %19 : vector<1x128xf32>
    %21 = math.tanh %20 : vector<1x128xf32>
    %cst_13 = arith.constant 2.000000e+00 : f32
    %22 = vector.broadcast %cst_13 : f32 to vector<1x128xf32>
    %23 = arith.mulf %21, %22 : vector<1x128xf32>
    %c0_14 = arith.constant 0 : index
    %c0_15 = arith.constant 0 : index
    %24 = vector.load %arg5[%c0_14, %c0_15] : memref<1x128xf32, #tpu.memory_space<vmem>>, vector<1x128xf32>
    tpu.vector_store %arg5[%c0_14, %c0_15], %23 {strides = array<i32>} : memref<1x128xf32, #tpu.memory_space<vmem>>, vector<1x128xf32>,
    %25 = vector.extract_strided_slice %12 {offsets = [32, 0], sizes = [32, 128], strides = [1, 1]} : vector<64x128xf32> to vector<32x128xf32>
    %c0_16 = arith.constant 0 : index
    %c2 = arith.constant 2 : index
    %26 = vector.load %arg3[%c0_16, %c2] : memref<64x128xf32, #tpu.memory_space<vmem>>, vector<32x1xf32>
    %c0_17 = arith.constant 0 : index
    %c3 = arith.constant 3 : index
    %27 = vector.load %arg3[%c0_17, %c3] : memref<64x128xf32, #tpu.memory_space<vmem>>, vector<32x1xf32>
    %28 = vector.broadcast %23 : vector<1x128xf32> to vector<32x128xf32>
    %29 = vector.broadcast %26 : vector<32x1xf32> to vector<32x128xf32>
    %30 = arith.mulf %28, %29 : vector<32x128xf32>
    %31 = vector.broadcast %27 : vector<32x1xf32> to vector<32x128xf32>
    %32 = arith.addf %30, %31 : vector<32x128xf32>
    %33 = arith.addf %25, %32 : vector<32x128xf32>
    %cst_18 = arith.constant 0.000000e+00 : f32
    %34 = vector.broadcast %cst_18 : f32 to vector<32x128xf32>
    %35 = arith.maximumf %33, %34 : vector<32x128xf32>
    %c1_19 = arith.constant 1 : index
    %c64_20 = arith.constant 64 : index
    %36 = vector.load %arg3[%c1_19, %c64_20] : memref<64x128xf32, #tpu.memory_space<vmem>>, vector<1x32xf32>
    %c0_21 = arith.constant 0 : index
    %c97 = arith.constant 97 : index
    %37 = vector.load %arg3[%c0_21, %c97] : memref<64x128xf32, #tpu.memory_space<vmem>>, vector<1x1xf32>
    %cst_22 = arith.constant dense<0.000000e+00> : vector<1x128xf32>
    %38 = tpu.matmul %36, %35, %cst_22 {dimension_numbers = #tpu.dot_dimension_numbers<[1], [0], [0], [1], [0, 0, 1, 1], [], []>} : vector<1x32xf32>, vector<32x128xf32>, vector<1x128xf32> -> vector<1x128xf32>
    %39 = vector.broadcast %37 : vector<1x1xf32> to vector<1x128xf32>
    %40 = arith.addf %38, %39 : vector<1x128xf32>
    %c0_23 = arith.constant 0 : index
    %c0_24 = arith.constant 0 : index
    %41 = vector.load %arg4[%c0_23, %c0_24] : memref<1x128xf32, #tpu.memory_space<vmem>>, vector<1x128xf32>
    tpu.vector_store %arg4[%c0_23, %c0_24], %40 {strides = array<i32>} : memref<1x128xf32, #tpu.memory_space<vmem>>, vector<1x128xf32>,
    return
  }
  func.func @transform_0(%arg0: i32) -> (i32, i32) {
    %c0_i32 = arith.constant 0 : i32
    %c0_i32_0 = arith.constant 0 : i32
    return %c0_i32, %arg0 : i32, i32
  }
  func.func @transform_1(%arg0: i32) -> (i32, i32) {
    %c0_i32 = arith.constant 0 : i32
    %c0_i32_0 = arith.constant 0 : i32
    %c0_i32_1 = arith.constant 0 : i32
    return %c0_i32, %c0_i32_0 : i32, i32
  }
  func.func @transform_2(%arg0: i32) -> (i32, i32) {
    %c0_i32 = arith.constant 0 : i32
    %c0_i32_0 = arith.constant 0 : i32
    %c0_i32_1 = arith.constant 0 : i32
    return %c0_i32, %c0_i32_0 : i32, i32
  }
  func.func @transform_3(%arg0: i32) -> (i32, i32) {
    %c0_i32 = arith.constant 0 : i32
    %c0_i32_0 = arith.constant 0 : i32
    return %c0_i32, %arg0 : i32, i32
  }
  func.func @transform_4(%arg0: i32) -> (i32, i32) {
    %c0_i32 = arith.constant 0 : i32
    %c0_i32_0 = arith.constant 0 : i32
    return %c0_i32, %arg0 : i32, i32
  }
}

</mosaic_0001>

<llo_original>
// kernel: tpu_custom_call.1
$region0: #{tpu_custom_call.1}
  #allocation0 [shape = 'u32[]', space=smem, size = 0x4, offset = 0x4, fixed_abs, tag = 'smem constant byte address 0x4 - core index']
  #allocation1 [shape = 'u32[144,128]{1,0:T(1,128)}', space=vmem, size = 0x12000, scoped, tag = 'internal scratch']
  %s0 = inlined_call_operand.hbm [shape: f32[8,128], index: 0, kind: input, shape index: {}]
  %s1 = inlined_call_operand.hbm [shape: f32[80,128], index: 1, kind: input, shape index: {}]
  %s2 = inlined_call_operand.hbm [shape: f32[64,128], index: 2, kind: input, shape index: {}]
  %s3 = inlined_call_operand.hbm [shape: f32[1,128], index: 3, kind: output, shape index: {0}]
  %s4 = inlined_call_operand.hbm [shape: f32[1,128], index: 4, kind: output, shape index: {1}]
  %5 = xla_tuple %s3, %s4
  %s6 = sld [smem:[#allocation0]]
  $region42: #{tpu_custom_call.1} parent=0
    _
  %s8 = ssub.s32 1, %s6
  %s9 = scalar_select 0, %s8, %s6
  $region1: #{tpu_custom_call.1} parent=0
    #allocation2 [shape = 'u8[4096]{0}', space=vmem, size = 0x1000, scoped, tag = 'input window, operand 0, single buffered']
    #allocation3 [shape = 's32[1]{0}', space=sflag, size = 0x4, scoped, tag = 'scoped memory for tpu_custom_call.1']
    #allocation4 [shape = 's32[1]{0}', space=sflag, size = 0x4, scoped, tag = 'scoped memory for tpu_custom_call.1']
    #allocation5 [shape = 'u8[40960]{0}', space=vmem, size = 0xa000, scoped, tag = 'input window, operand 1, single buffered']
    #allocation6 [shape = 's32[1]{0}', space=sflag, size = 0x4, scoped, tag = 'scoped memory for tpu_custom_call.1']
    #allocation7 [shape = 'u8[32768]{0}', space=vmem, size = 0x8000, scoped, tag = 'input window, operand 2, single buffered']
    #allocation8 [shape = 'u8[512]{0}', space=vmem, size = 0x400, scoped, tag = 'output window, operand 0, single buffered']
    #allocation9 [shape = 'u8[512]{0}', space=vmem, size = 0x400, scoped, tag = 'output window, operand 1, single buffered']
    #allocation10 [shape = 's32[1]{0}', space=sflag, size = 0x4, scoped, tag = 'scoped memory for tpu_custom_call.1']
    %10 = vsyncpa [#allocation3], 0
    %11 = vsyncpa [#allocation6], 0
    %12 = vsyncpa [#allocation4], 0
    %13 = vsyncpa [#allocation10], 0
    // Predicated region
    $region2: #{tpu_custom_call.1} parent=1 // pred_check
      _
    $region3: #{tpu_custom_call.1} parent=1 // pred_check_branch
      %15 = sbr.rel (0) target = $region5
    $region4: #{tpu_custom_call.1} parent=1 // pred_region
      %s17 = ssub.s32 128, 128
      %18 = vsyncadd [#allocation3], %s17
      %s20 = sshll.u32 [#allocation2], 4
      %s21 = int_to_ptr.vmem [resolvable:$true] %s20
      %23 = dma.hbm_to_vmem [thread:$0]  %s0, 128, %s21, [#allocation3]
    $region5: #{tpu_custom_call.1} parent=1 // pred_fallthru
      _
    // Predicated region
    $region6: #{tpu_custom_call.1} parent=1 // pred_check
      _
    $region7: #{tpu_custom_call.1} parent=1 // pred_check_branch
      %25 = sbr.rel (0) target = $region9
    $region8: #{tpu_custom_call.1} parent=1 // pred_region
      %s27 = ssub.s32 1280, 1280
      %28 = vsyncadd [#allocation6], %s27
      %s29 = sshll.u32 [#allocation5], 4
      %s30 = int_to_ptr.vmem [resolvable:$true] %s29
      %35 = dma.hbm_to_vmem [thread:$0]  %s1, 1280, %s30, [#allocation6], 128, 128, 8
    $region9: #{tpu_custom_call.1} parent=1 // pred_fallthru
      _
    // Predicated region
    $region10: #{tpu_custom_call.1} parent=1 // pred_check
      _
    $region11: #{tpu_custom_call.1} parent=1 // pred_check_branch
      %37 = sbr.rel (0) target = $region13
    $region12: #{tpu_custom_call.1} parent=1 // pred_region
      %s39 = ssub.s32 1024, 1024
      %40 = vsyncadd [#allocation6], %s39
      %s41 = sshll.u32 [#allocation7], 4
      %s42 = int_to_ptr.vmem [resolvable:$true] %s41
      %47 = dma.hbm_to_vmem [thread:$0]  %s2, 1024, %s42, [#allocation6], 128, 128, 8
    $region13: #{tpu_custom_call.1} parent=1 // pred_fallthru
      _
    // Predicated region
    $region14: #{tpu_custom_call.1} parent=1 // pred_check
      _
    $region15: #{tpu_custom_call.1} parent=1 // pred_check_branch
      %49 = sbr.rel (0) target = $region17
    $region16: #{tpu_custom_call.1} parent=1 // pred_region
      %50 = dma.done [#allocation3], 128
    $region17: #{tpu_custom_call.1} parent=1 // pred_fallthru
      _
    // Predicated region
    $region18: #{tpu_custom_call.1} parent=1 // pred_check
      _
    $region19: #{tpu_custom_call.1} parent=1 // pred_check_branch
      %52 = sbr.rel (0) target = $region21
    $region20: #{tpu_custom_call.1} parent=1 // pred_region
      %53 = dma.done [#allocation6], 1280
    $region21: #{tpu_custom_call.1} parent=1 // pred_fallthru
      _
    // Predicated region
    $region22: #{tpu_custom_call.1} parent=1 // pred_check
      _
    $region23: #{tpu_custom_call.1} parent=1 // pred_check_branch
      %55 = sbr.rel (0) target = $region25
    $region24: #{tpu_custom_call.1} parent=1 // pred_region
      %56 = dma.done [#allocation6], 1024
    $region25: #{tpu_custom_call.1} parent=1 // pred_fallthru
      _
    %v57 = vld [vmem:[#allocation2] sm:$0xff]
    %v58 = vld [vmem:[#allocation5] sm:$0xff]
    %v59 = vld [vmem:[#allocation5 + $0x8] sm:$0xff]
    %v60 = vld [vmem:[#allocation7] sm:$0xff]
    %v61 = vld [vmem:[#allocation7 + $0x8] sm:$0xff]
    %63 = vset.pattern.permute.xlu0 0
    %64 = vperm.xlu0 %63, %v60
    %v65 = vpop.permute.xlu0 %64
    %68 = vset.pattern.permute.xlu0 0
    %69 = vperm.xlu0 %68, %v61
    %v70 = vpop.permute.xlu0 %69
    %vm72 = vcmask 64512
    %v74 = vsel %vm72, %v58, 0
    %v77 = vsel %vm72, %v59, 0
    %79 = vmatprep.subr.mxu0 0.0
    %80 = vmatpush1.msra.mxu0 %v57
    %81 = vmatprep.subr.mxu0 0.0
    %82 = vmatpush1.msra.mxu0 0.0
    %83 = vmatprep.subr.mxu0 0.0
    %84 = vmatpush1.msra.mxu0 0.0
    %85 = vmatprep.subr.mxu0 0.0
    %86 = vmatpush1.msra.mxu0 0.0
    %87 = vmatprep.subr.mxu0 0.0
    %88 = vmatpush1.msra.mxu0 0.0
    %89 = vmatprep.subr.mxu0 0.0
    %90 = vmatpush1.msra.mxu0 0.0
    %91 = vmatprep.subr.mxu0 0.0
    %92 = vmatpush1.msra.mxu0 0.0
    %93 = vmatprep.subr.mxu0 0.0
    %94 = vmatpush1.msra.mxu0 0.0
    %95 = vmatprep.subr.mxu0 0.0
    %96 = vmatpush1.msra.mxu0 0.0
    %97 = vmatprep.subr.mxu0 0.0
    %98 = vmatpush1.msra.mxu0 0.0
    %99 = vmatprep.subr.mxu0 0.0
    %100 = vmatpush1.msra.mxu0 0.0
    %101 = vmatprep.subr.mxu0 0.0
    %102 = vmatpush1.msra.mxu0 0.0
    %103 = vmatprep.subr.mxu0 0.0
    %104 = vmatpush1.msra.mxu0 0.0
    %105 = vmatprep.subr.mxu0 0.0
    %106 = vmatpush1.msra.mxu0 0.0
    %107 = vmatprep.subr.mxu0 0.0
    %108 = vmatpush1.msra.mxu0 0.0
    %109 = vmatprep.subr.mxu0 0.0
    %110 = vmatpush1.msra.mxu0 0.0
    %111 = vmatprep.subr.mxu0 0.0
    %112 = vmatpush1.msra.mxu0 0.0
    %113 = vmatprep.subr.mxu0 0.0
    %114 = vmatpush1.msra.mxu0 0.0
    %115 = vmatprep.subr.mxu0 0.0
    %116 = vmatpush1.msra.mxu0 0.0
    %117 = vmatprep.subr.mxu0 0.0
    %118 = vmatpush1.msra.mxu0 0.0
    %119 = vmatprep.subr.mxu0 0.0
    %120 = vmatpush1.msra.mxu0 0.0
    %121 = vmatprep.subr.mxu0 0.0
    %122 = vmatpush1.msra.mxu0 0.0
    %123 = vmatprep.subr.mxu0 0.0
    %124 = vmatpush1.msra.mxu0 0.0
    %125 = vmatprep.subr.mxu0 0.0
    %126 = vmatpush1.msra.mxu0 0.0
    %127 = vmatprep.subr.mxu0 0.0
    %128 = vmatpush1.msra.mxu0 0.0
    %129 = vmatprep.subr.mxu0 0.0
    %130 = vmatpush1.msra.mxu0 0.0
    %131 = vmatprep.subr.mxu0 0.0
    %132 = vmatpush1.msra.mxu0 0.0
    %133 = vmatprep.subr.mxu0 0.0
    %134 = vmatpush1.msra.mxu0 0.0
    %135 = vmatprep.subr.mxu0 0.0
    %136 = vmatpush1.msra.mxu0 0.0
    %137 = vmatprep.subr.mxu0 0.0
    %138 = vmatpush1.msra.mxu0 0.0
    %139 = vmatprep.subr.mxu0 0.0
    %140 = vmatpush1.msra.mxu0 0.0
    %141 = vmatprep.subr.mxu0 0.0
    %142 = vmatpush1.msra.mxu0 0.0
    %143 = vmatprep.mubr.f32.mxu0 0.0
    %144 = vmatmul.mubr.f32.gmra.mrb[0].mxu0 %v74
    %v145 = vpop.f32.mrb[0].mxu0
    %v146 = vadd.f32 %v65, %v145
    %v147 = vpop.f32.mrb[0].mxu0
    %148 = vmatprep.mubr.f32.mxu0 0.0
    %149 = vmatmul.mubr.f32.gmra.mrb[0].mxu0 %v77
    %v150 = vpop.f32.mrb[0].mxu0
    %v151 = vadd.f32 %v70, %v150
    %v152 = vpop.f32.mrb[0].mxu0
    %153 = vdwg.mxu0
    %v154 = vmax.f32 %v146, 0.0
    %v155 = vmax.f32 %v151, 0.0
    %v156 = vld [vmem:[#allocation5 + $0x10] sm:$0xff]
    %v157 = vld [vmem:[#allocation5 + $0x18] sm:$0xff]
    %v158 = vld [vmem:[#allocation5 + $0x20] sm:$0xff]
    %v159 = vld [vmem:[#allocation5 + $0x28] sm:$0xff]
    %v160 = vld [vmem:[#allocation5 + $0x30] sm:$0xff]
    %v161 = vld [vmem:[#allocation5 + $0x38] sm:$0xff]
    %v162 = vld [vmem:[#allocation5 + $0x40] sm:$0xff]
    %v163 = vld [vmem:[#allocation5 + $0x48] sm:$0xff]
    %v164 = vld [vmem:[#allocation7] sm:$0xff]
    %v165 = vld [vmem:[#allocation7 + $0x8] sm:$0xff]
    %v166 = vld [vmem:[#allocation7 + $0x10] sm:$0xff]
    %v167 = vld [vmem:[#allocation7 + $0x18] sm:$0xff]
    %v168 = vld [vmem:[#allocation7 + $0x20] sm:$0xff]
    %v169 = vld [vmem:[#allocation7 + $0x28] sm:$0xff]
    %v170 = vld [vmem:[#allocation7 + $0x30] sm:$0xff]
    %v171 = vld [vmem:[#allocation7 + $0x38] sm:$0xff]
    %173 = vset.pattern.permute.xlu0 1
    %174 = vperm.xlu0 %173, %v164
    %v175 = vpop.permute.xlu0 %174
    %178 = vset.pattern.permute.xlu0 1
    %179 = vperm.xlu0 %178, %v165
    %v180 = vpop.permute.xlu0 %179
    %183 = vset.pattern.permute.xlu0 1
    %184 = vperm.xlu0 %183, %v166
    %v185 = vpop.permute.xlu0 %184
    %188 = vset.pattern.permute.xlu0 1
    %189 = vperm.xlu0 %188, %v167
    %v190 = vpop.permute.xlu0 %189
    %193 = vset.pattern.permute.xlu0 1
    %194 = vperm.xlu0 %193, %v168
    %v195 = vpop.permute.xlu0 %194
    %198 = vset.pattern.permute.xlu0 1
    %199 = vperm.xlu0 %198, %v169
    %v200 = vpop.permute.xlu0 %199
    %203 = vset.pattern.permute.xlu0 1
    %204 = vperm.xlu0 %203, %v170
    %v205 = vpop.permute.xlu0 %204
    %208 = vset.pattern.permute.xlu0 1
    %209 = vperm.xlu0 %208, %v171
    %v210 = vpop.permute.xlu0 %209
    %vm212 = vcmask 130048
    %v214 = vsel %vm212, %v156, 0
    %v217 = vsel %vm212, %v157, 0
    %v220 = vsel %vm212, %v158, 0
    %v223 = vsel %vm212, %v159, 0
    %v226 = vsel %vm212, %v160, 0
    %v229 = vsel %vm212, %v161, 0
    %v232 = vsel %vm212, %v162, 0
    %v235 = vsel %vm212, %v163, 0
    %237 = vmatprep.subr.mxu0 0.0
    %238 = vmatpush1.msra.mxu0 %v154
    %239 = vmatprep.subr.mxu0 0.0
    %240 = vmatpush1.msra.mxu0 %v155
    %241 = vmatprep.subr.mxu0 0.0
    %242 = vmatpush1.msra.mxu0 0.0
    %243 = vmatprep.subr.mxu0 0.0
    %244 = vmatpush1.msra.mxu0 0.0
    %245 = vmatprep.subr.mxu0 0.0
    %246 = vmatpush1.msra.mxu0 0.0
    %247 = vmatprep.subr.mxu0 0.0
    %248 = vmatpush1.msra.mxu0 0.0
    %249 = vmatprep.subr.mxu0 0.0
    %250 = vmatpush1.msra.mxu0 0.0
    %251 = vmatprep.subr.mxu0 0.0
    %252 = vmatpush1.msra.mxu0 0.0
    %253 = vmatprep.subr.mxu0 0.0
    %254 = vmatpush1.msra.mxu0 0.0
    %255 = vmatprep.subr.mxu0 0.0
    %256 = vmatpush1.msra.mxu0 0.0
    %257 = vmatprep.subr.mxu0 0.0
    %258 = vmatpush1.msra.mxu0 0.0
    %259 = vmatprep.subr.mxu0 0.0
    %260 = vmatpush1.msra.mxu0 0.0
    %261 = vmatprep.subr.mxu0 0.0
    %262 = vmatpush1.msra.mxu0 0.0
    %263 = vmatprep.subr.mxu0 0.0
    %264 = vmatpush1.msra.mxu0 0.0
    %265 = vmatprep.subr.mxu0 0.0
    %266 = vmatpush1.msra.mxu0 0.0
    %267 = vmatprep.subr.mxu0 0.0
    %268 = vmatpush1.msra.mxu0 0.0
    %269 = vmatprep.subr.mxu0 0.0
    %270 = vmatpush1.msra.mxu0 0.0
    %271 = vmatprep.subr.mxu0 0.0
    %272 = vmatpush1.msra.mxu0 0.0
    %273 = vmatprep.subr.mxu0 0.0
    %274 = vmatpush1.msra.mxu0 0.0
    %275 = vmatprep.subr.mxu0 0.0
    %276 = vmatpush1.msra.mxu0 0.0
    %277 = vmatprep.subr.mxu0 0.0
    %278 = vmatpush1.msra.mxu0 0.0
    %279 = vmatprep.subr.mxu0 0.0
    %280 = vmatpush1.msra.mxu0 0.0
    %281 = vmatprep.subr.mxu0 0.0
    %282 = vmatpush1.msra.mxu0 0.0
    %283 = vmatprep.subr.mxu0 0.0
    %284 = vmatpush1.msra.mxu0 0.0
    %285 = vmatprep.subr.mxu0 0.0
    %286 = vmatpush1.msra.mxu0 0.0
    %287 = vmatprep.subr.mxu0 0.0
    %288 = vmatpush1.msra.mxu0 0.0
    %289 = vmatprep.subr.mxu0 0.0
    %290 = vmatpush1.msra.mxu0 0.0
    %291 = vmatprep.subr.mxu0 0.0
    %292 = vmatpush1.msra.mxu0 0.0
    %293 = vmatprep.subr.mxu0 0.0
    %294 = vmatpush1.msra.mxu0 0.0
    %295 = vmatprep.subr.mxu0 0.0
    %296 = vmatpush1.msra.mxu0 0.0
    %297 = vmatprep.subr.mxu0 0.0
    %298 = vmatpush1.msra.mxu0 0.0
    %299 = vmatprep.subr.mxu0 0.0
    %300 = vmatpush1.msra.mxu0 0.0
    %301 = vmatprep.mubr.f32.mxu0 0.0
    %302 = vmatmul.mubr.f32.gmra.mrb[0].mxu0 %v214
    %v303 = vpop.f32.mrb[0].mxu0
    %v304 = vadd.f32 %v175, %v303
    %v305 = vpop.f32.mrb[0].mxu0
    %306 = vmatprep.mubr.f32.mxu0 0.0
    %307 = vmatmul.mubr.f32.gmra.mrb[0].mxu0 %v217
    %v308 = vpop.f32.mrb[0].mxu0
    %v309 = vadd.f32 %v180, %v308
    %v310 = vpop.f32.mrb[0].mxu0
    %311 = vmatprep.mubr.f32.mxu0 0.0
    %312 = vmatmul.mubr.f32.gmra.mrb[0].mxu0 %v220
    %v313 = vpop.f32.mrb[0].mxu0
    %v314 = vadd.f32 %v185, %v313
    %v315 = vpop.f32.mrb[0].mxu0
    %316 = vmatprep.mubr.f32.mxu0 0.0
    %317 = vmatmul.mubr.f32.gmra.mrb[0].mxu0 %v223
    %v318 = vpop.f32.mrb[0].mxu0
    %v319 = vadd.f32 %v190, %v318
    %v320 = vpop.f32.mrb[0].mxu0
    %321 = vmatprep.mubr.f32.mxu0 0.0
    %322 = vmatmul.mubr.f32.gmra.mrb[0].mxu0 %v226
    %v323 = vpop.f32.mrb[0].mxu0
    %v324 = vadd.f32 %v195, %v323
    %v325 = vpop.f32.mrb[0].mxu0
    %326 = vmatprep.mubr.f32.mxu0 0.0
    %327 = vmatmul.mubr.f32.gmra.mrb[0].mxu0 %v229
    %v328 = vpop.f32.mrb[0].mxu0
    %v329 = vadd.f32 %v200, %v328
    %v330 = vpop.f32.mrb[0].mxu0
    %331 = vmatprep.mubr.f32.mxu0 0.0
    %332 = vmatmul.mubr.f32.gmra.mrb[0].mxu0 %v232
    %v333 = vpop.f32.mrb[0].mxu0
    %v334 = vadd.f32 %v205, %v333
    %v335 = vpop.f32.mrb[0].mxu0
    %336 = vmatprep.mubr.f32.mxu0 0.0
    %337 = vmatmul.mubr.f32.gmra.mrb[0].mxu0 %v235
    %v338 = vpop.f32.mrb[0].mxu0
    %v339 = vadd.f32 %v210, %v338
    %v340 = vpop.f32.mrb[0].mxu0
    %341 = vdwg.mxu0
    %v342 = vmax.f32 %v304, 0.0
    %v343 = vmax.f32 %v309, 0.0
    %v344 = vmax.f32 %v314, 0.0
    %v345 = vmax.f32 %v319, 0.0
    %v346 = vld [vmem:[#allocation7] sm:$0x1]
    %348 = vset.pattern.permute.xlu0 96
    %349 = vperm.xlu0 %348, %v346
    %v350 = vpop.permute.xlu0 %349
    %352 = vrot.lane.b32.xlu0 %v346, 64
    %v353 = vpop.permute.xlu0 %352
    %vm354 = vcmask 261120
    %v355 = vsel %vm354, %v353, 0
    %357 = vmatprep.subr.mxu0 0.0
    %358 = vmatpush1.msra.mxu0 %v342
    %359 = vmatprep.subr.mxu0 0.0
    %360 = vmatpush1.msra.mxu0 %v343
    %361 = vmatprep.subr.mxu0 0.0
    %362 = vmatpush1.msra.mxu0 %v344
    %363 = vmatprep.subr.mxu0 0.0
    %364 = vmatpush1.msra.mxu0 %v345
    %365 = vmatprep.subr.mxu0 0.0
    %366 = vmatpush1.msra.mxu0 0.0
    %367 = vmatprep.subr.mxu0 0.0
    %368 = vmatpush1.msra.mxu0 0.0
    %369 = vmatprep.subr.mxu0 0.0
    %370 = vmatpush1.msra.mxu0 0.0
    %371 = vmatprep.subr.mxu0 0.0
    %372 = vmatpush1.msra.mxu0 0.0
    %373 = vmatprep.subr.mxu0 0.0
    %374 = vmatpush1.msra.mxu0 0.0
    %375 = vmatprep.subr.mxu0 0.0
    %376 = vmatpush1.msra.mxu0 0.0
    %377 = vmatprep.subr.mxu0 0.0
    %378 = vmatpush1.msra.mxu0 0.0
    %379 = vmatprep.subr.mxu0 0.0
    %380 = vmatpush1.msra.mxu0 0.0
    %381 = vmatprep.subr.mxu0 0.0
    %382 = vmatpush1.msra.mxu0 0.0
    %383 = vmatprep.subr.mxu0 0.0
    %384 = vmatpush1.msra.mxu0 0.0
    %385 = vmatprep.subr.mxu0 0.0
    %386 = vmatpush1.msra.mxu0 0.0
    %387 = vmatprep.subr.mxu0 0.0
    %388 = vmatpush1.msra.mxu0 0.0
    %389 = vmatprep.subr.mxu0 0.0
    %390 = vmatpush1.msra.mxu0 0.0
    %391 = vmatprep.subr.mxu0 0.0
    %392 = vmatpush1.msra.mxu0 0.0
    %393 = vmatprep.subr.mxu0 0.0
    %394 = vmatpush1.msra.mxu0 0.0
    %395 = vmatprep.subr.mxu0 0.0
    %396 = vmatpush1.msra.mxu0 0.0
    %397 = vmatprep.subr.mxu0 0.0
    %398 = vmatpush1.msra.mxu0 0.0
    %399 = vmatprep.subr.mxu0 0.0
    %400 = vmatpush1.msra.mxu0 0.0
    %401 = vmatprep.subr.mxu0 0.0
    %402 = vmatpush1.msra.mxu0 0.0
    %403 = vmatprep.subr.mxu0 0.0
    %404 = vmatpush1.msra.mxu0 0.0
    %405 = vmatprep.subr.mxu0 0.0
    %406 = vmatpush1.msra.mxu0 0.0
    %407 = vmatprep.subr.mxu0 0.0
    %408 = vmatpush1.msra.mxu0 0.0
    %409 = vmatprep.subr.mxu0 0.0
    %410 = vmatpush1.msra.mxu0 0.0
    %411 = vmatprep.subr.mxu0 0.0
    %412 = vmatpush1.msra.mxu0 0.0
    %413 = vmatprep.subr.mxu0 0.0
    %414 = vmatpush1.msra.mxu0 0.0
    %415 = vmatprep.subr.mxu0 0.0
    %416 = vmatpush1.msra.mxu0 0.0
    %417 = vmatprep.subr.mxu0 0.0
    %418 = vmatpush1.msra.mxu0 0.0
    %419 = vmatprep.subr.mxu0 0.0
    %420 = vmatpush1.msra.mxu0 0.0
    %421 = vmatprep.mubr.f32.mxu0 0.0
    %422 = vmatmul.mubr.f32.gmra.mrb[0].mxu0 %v355
    %v423 = vpop.f32.mrb[0].mxu0
    %v424 = vadd.f32 %v350, %v423
    %v425 = vpop.f32.mrb[0].mxu0
    %426 = vdwg.mxu0
    %v427 = vtanh.pop %v424
    %v428 = vmul.f32 %v427, 2.0
    %429 = vst [vmem:[#allocation9] sm:$0x1] %v428
    %v430 = vld [vmem:[#allocation7] sm:$0xff]
    %v431 = vld [vmem:[#allocation7 + $0x8] sm:$0xff]
    %v432 = vld [vmem:[#allocation7 + $0x10] sm:$0xff]
    %v433 = vld [vmem:[#allocation7 + $0x18] sm:$0xff]
    %v434 = vlaneseq
    %v435 = vshrl.u32 %v434, 7
    %v436 = vsub.s32 0, %v435
    %v437 = vrot.slane %v428, %v436
    %439 = vset.pattern.permute.xlu0 2
    %440 = vperm.xlu0 %439, %v430
    %v441 = vpop.permute.xlu0 %440
    %444 = vset.pattern.permute.xlu0 2
    %445 = vperm.xlu0 %444, %v431
    %v446 = vpop.permute.xlu0 %445
    %449 = vset.pattern.permute.xlu0 2
    %450 = vperm.xlu0 %449, %v432
    %v451 = vpop.permute.xlu0 %450
    %454 = vset.pattern.permute.xlu0 2
    %455 = vperm.xlu0 %454, %v433
    %v456 = vpop.permute.xlu0 %455
    %v458 = vmul.f32 %v437, %v441
    %v459 = vmul.f32 %v437, %v446
    %v460 = vmul.f32 %v437, %v451
    %v461 = vmul.f32 %v437, %v456
    %462 = vset.pattern.permute.xlu0 3
    %463 = vperm.xlu0 %462, %v430
    %v464 = vpop.permute.xlu0 %463
    %466 = vset.pattern.permute.xlu0 3
    %467 = vperm.xlu0 %466, %v431
    %v468 = vpop.permute.xlu0 %467
    %470 = vset.pattern.permute.xlu0 3
    %471 = vperm.xlu0 %470, %v432
    %v472 = vpop.permute.xlu0 %471
    %474 = vset.pattern.permute.xlu0 3
    %475 = vperm.xlu0 %474, %v433
    %v476 = vpop.permute.xlu0 %475
    %v478 = vadd.f32 %v458, %v464
    %v479 = vadd.f32 %v459, %v468
    %v480 = vadd.f32 %v460, %v472
    %v481 = vadd.f32 %v461, %v476
    %v482 = vadd.f32 %v324, %v478
    %v483 = vadd.f32 %v329, %v479
    %v484 = vadd.f32 %v334, %v480
    %v485 = vadd.f32 %v339, %v481
    %v486 = vmax.f32 %v482, 0.0
    %v487 = vmax.f32 %v483, 0.0
    %v488 = vmax.f32 %v484, 0.0
    %v489 = vmax.f32 %v485, 0.0
    %v490 = vld [vmem:[#allocation7 + $0x1] sm:$0x1]
    %v491 = vld [vmem:[#allocation7] sm:$0x1]
    %493 = vset.pattern.permute.xlu0 97
    %494 = vperm.xlu0 %493, %v491
    %v495 = vpop.permute.xlu0 %494
    %498 = vrot.lane.b32.xlu0 %v490, 64
    %v499 = vpop.permute.xlu0 %498
    %v500 = vsel %vm354, %v499, 0
    %502 = vmatprep.subr.mxu0 0.0
    %503 = vmatpush1.msra.mxu0 %v486
    %504 = vmatprep.subr.mxu0 0.0
    %505 = vmatpush1.msra.mxu0 %v487
    %506 = vmatprep.subr.mxu0 0.0
    %507 = vmatpush1.msra.mxu0 %v488
    %508 = vmatprep.subr.mxu0 0.0
    %509 = vmatpush1.msra.mxu0 %v489
    %510 = vmatprep.subr.mxu0 0.0
    %511 = vmatpush1.msra.mxu0 0.0
    %512 = vmatprep.subr.mxu0 0.0
    %513 = vmatpush1.msra.mxu0 0.0
    %514 = vmatprep.subr.mxu0 0.0
    %515 = vmatpush1.msra.mxu0 0.0
    %516 = vmatprep.subr.mxu0 0.0
    %517 = vmatpush1.msra.mxu0 0.0
    %518 = vmatprep.subr.mxu0 0.0
    %519 = vmatpush1.msra.mxu0 0.0
    %520 = vmatprep.subr.mxu0 0.0
    %521 = vmatpush1.msra.mxu0 0.0
    %522 = vmatprep.subr.mxu0 0.0
    %523 = vmatpush1.msra.mxu0 0.0
    %524 = vmatprep.subr.mxu0 0.0
    %525 = vmatpush1.msra.mxu0 0.0
    %526 = vmatprep.subr.mxu0 0.0
    %527 = vmatpush1.msra.mxu0 0.0
    %528 = vmatprep.subr.mxu0 0.0
    %529 = vmatpush1.msra.mxu0 0.0
    %530 = vmatprep.subr.mxu0 0.0
    %531 = vmatpush1.msra.mxu0 0.0
    %532 = vmatprep.subr.mxu0 0.0
    %533 = vmatpush1.msra.mxu0 0.0
    %534 = vmatprep.subr.mxu0 0.0
    %535 = vmatpush1.msra.mxu0 0.0
    %536 = vmatprep.subr.mxu0 0.0
    %537 = vmatpush1.msra.mxu0 0.0
    %538 = vmatprep.subr.mxu0 0.0
    %539 = vmatpush1.msra.mxu0 0.0
    %540 = vmatprep.subr.mxu0 0.0
    %541 = vmatpush1.msra.mxu0 0.0
    %542 = vmatprep.subr.mxu0 0.0
    %543 = vmatpush1.msra.mxu0 0.0
    %544 = vmatprep.subr.mxu0 0.0
    %545 = vmatpush1.msra.mxu0 0.0
    %546 = vmatprep.subr.mxu0 0.0
    %547 = vmatpush1.msra.mxu0 0.0
    %548 = vmatprep.subr.mxu0 0.0
    %549 = vmatpush1.msra.mxu0 0.0
    %550 = vmatprep.subr.mxu0 0.0
    %551 = vmatpush1.msra.mxu0 0.0
    %552 = vmatprep.subr.mxu0 0.0
    %553 = vmatpush1.msra.mxu0 0.0
    %554 = vmatprep.subr.mxu0 0.0
    %555 = vmatpush1.msra.mxu0 0.0
    %556 = vmatprep.subr.mxu0 0.0
    %557 = vmatpush1.msra.mxu0 0.0
    %558 = vmatprep.subr.mxu0 0.0
    %559 = vmatpush1.msra.mxu0 0.0
    %560 = vmatprep.subr.mxu0 0.0
    %561 = vmatpush1.msra.mxu0 0.0
    %562 = vmatprep.subr.mxu0 0.0
    %563 = vmatpush1.msra.mxu0 0.0
    %564 = vmatprep.subr.mxu0 0.0
    %565 = vmatpush1.msra.mxu0 0.0
    %566 = vmatprep.mubr.f32.mxu0 0.0
    %567 = vmatmul.mubr.f32.gmra.mrb[0].mxu0 %v500
    %v568 = vpop.f32.mrb[0].mxu0
    %v569 = vadd.f32 %v495, %v568
    %v570 = vpop.f32.mrb[0].mxu0
    %571 = vdwg.mxu0
    %572 = vst [vmem:[#allocation8] sm:$0x1] %v569
    // Predicated region
    $region26: #{tpu_custom_call.1} parent=1 // pred_check
      _
    $region27: #{tpu_custom_call.1} parent=1 // pred_check_branch
      %574 = sbr.rel (0) target = $region29
    $region28: #{tpu_custom_call.1} parent=1 // pred_region
      %s576 = ssub.s32 16, 16
      %577 = vsyncadd [#allocation4], %s576
      %s579 = sshll.u32 [#allocation8], 4
      %s580 = int_to_ptr.vmem [resolvable:$true] %s579
      %582 = dma.vmem_to_hbm [thread:$0]  %s580, 16, %s3, [#allocation4]
    $region29: #{tpu_custom_call.1} parent=1 // pred_fallthru
      _
    // Predicated region
    $region30: #{tpu_custom_call.1} parent=1 // pred_check
      _
    $region31: #{tpu_custom_call.1} parent=1 // pred_check_branch
      %584 = sbr.rel (0) target = $region33
    $region32: #{tpu_custom_call.1} parent=1 // pred_region
      %s586 = ssub.s32 16, 16
      %587 = vsyncadd [#allocation10], %s586
      %s589 = sshll.u32 [#allocation9], 4
      %s590 = int_to_ptr.vmem [resolvable:$true] %s589
      %592 = dma.vmem_to_hbm [thread:$0]  %s590, 16, %s4, [#allocation10]
    $region33: #{tpu_custom_call.1} parent=1 // pred_fallthru
      _
    // Predicated region
    $region34: #{tpu_custom_call.1} parent=1 // pred_check
      _
    $region35: #{tpu_custom_call.1} parent=1 // pred_check_branch
      %594 = sbr.rel (0) target = $region37
    $region36: #{tpu_custom_call.1} parent=1 // pred_region
      %595 = dma.done [#allocation4], 16
    $region37: #{tpu_custom_call.1} parent=1 // pred_fallthru
      _
    // Predicated region
    $region38: #{tpu_custom_call.1} parent=1 // pred_check
      _
    $region39: #{tpu_custom_call.1} parent=1 // pred_check_branch
      %597 = sbr.rel (0) target = $region41
    $region40: #{tpu_custom_call.1} parent=1 // pred_region
      %598 = dma.done [#allocation10], 16
    $region41: #{tpu_custom_call.1} parent=1 // pred_fallthru
      _
    %599 = vsyncpa [#allocation3], 1
    %600 = vsyncpa [#allocation6], 1
    %601 = vsyncpa [#allocation4], 1
    %602 = vsyncpa [#allocation10], 1

</llo_original>
